<compile_context>
chip_gen: v7x
topology: tpu7x:2x2x1
jax: 0.10.0
libtpu: 0.0.40
codegen_flags: <defaults>
</compile_context>

<pallas_src>
import jax
import jax.numpy as jnp
from jax import lax
from jax.experimental import pallas as pl
from jax.experimental.pallas import tpu as pltpu


def gate_kernel(xj_ref, e_ref, xi_ref, wj_ref, we_ref, wi_ref, b_ref, o_ref):
    # xj/e/xi: [TILE_N, in_size]   wj/we/wi: [out_size, in_size]   b: [1, out_size]
    # Contract on dim 1 of both operands -> [TILE_N, out_size]; no transposes.
    dims = (((1,), (1,)), ((), ()))
    acc = lax.dot_general(xj_ref[...], wj_ref[...], dims,
                          preferred_element_type=jnp.float32)
    acc = acc + lax.dot_general(e_ref[...], we_ref[...], dims,
                                preferred_element_type=jnp.float32)
    acc = acc + lax.dot_general(xi_ref[...], wi_ref[...], dims,
                                preferred_element_type=jnp.float32)
    acc = acc + b_ref[...]                      # f32 bias add
    o_ref[...] = jnp.tanh(acc).astype(o_ref.dtype)   # f32 tanh, then cast


def gate_forward(x_i, x_j, e_ij, weight, bias, tile_n=1024):
    """Gate forward.

    x_i, x_j, e_ij : [N, in_size]
    weight         : [out_size, in_size * 3]  (PyTorch Linear layout)
    bias           : [out_size]
    """
    N, in_size = x_i.shape
    O, K = weight.shape
    assert K == 3 * in_size, "weight must be [out, in_size * dim_coff] with dim_coff=3"

    # Row tile: as large as fits (mem-bound), but never larger than N.
    tile_n = min(tile_n, N)
    if tile_n < N:
        # sublane alignment when tiling (the full-extent case is always legal)
        tile_n = max(8, (tile_n // 8) * 8)
    grid = (pl.cdiv(N, tile_n),)

    # One-time split of the tiny parameter (no transpose materialized anywhere).
    w_j = weight[:, :in_size]            # multiplies x_j
    w_e = weight[:, in_size:2 * in_size]  # multiplies e_ij
    w_i = weight[:, 2 * in_size:]        # multiplies x_i
    b2d = bias.reshape(1, O)

    row_spec = pl.BlockSpec((tile_n, in_size), lambda i: (i, 0))
    w_spec = pl.BlockSpec((O, in_size), lambda i: (0, 0))   # VMEM-resident across grid
    b_spec = pl.BlockSpec((1, O), lambda i: (0, 0))

    cost = pl.CostEstimate(
        flops=2 * N * K * O,
        transcendentals=N * O,
        bytes_accessed=4 * (N * K + K * O + N * O + O),
    )

    return pl.pallas_call(
        gate_kernel,
        grid=grid,
        in_specs=[row_spec, row_spec, row_spec, w_spec, w_spec, w_spec, b_spec],
        out_specs=pl.BlockSpec((tile_n, O), lambda i: (i, 0)),
        out_shape=jax.ShapeDtypeStruct((N, O), jnp.float32),
        compiler_params=pltpu.CompilerParams(
            dimension_semantics=("parallel",)),
        cost_estimate=cost,
    )(x_j, e_ij, x_i, w_j, w_e, w_i, b2d)


if __name__ == "__main__":
    # Small shapes consistent with the module; N chosen so the tiled grid
    # actually has multiple steps (tile_n=8 -> grid=(3,)).
    N = 24          # number of edges
    in_size = 32    # per-tensor feature size
    dim_coff = 3    # cat([x_j, e_ij, x_i]) -> 3 * in_size
    out_size = 32

    key = jax.random.PRNGKey(0)
    k_xi, k_xj, k_e, k_w, k_b = jax.random.split(key, 5)

    x_i = jax.random.normal(k_xi, (N, in_size), dtype=jnp.float32)
    x_j = jax.random.normal(k_xj, (N, in_size), dtype=jnp.float32)
    e_ij = jax.random.normal(k_e, (N, in_size), dtype=jnp.float32)

    # PyTorch Linear shapes: weight [out, in], bias [out].
    K = in_size * dim_coff
    bound = 1.0 / (K ** 0.5)
    weight = jax.random.uniform(k_w, (out_size, K), jnp.float32, -bound, bound)
    bias = jax.random.uniform(k_b, (out_size,), jnp.float32, -bound, bound)

    out = gate_forward(x_i, x_j, e_ij, weight, bias, tile_n=8)
    out = jax.block_until_ready(out)

    # Pure-JAX reference check (matches the PyTorch forward).
    ref = jnp.tanh(jnp.concatenate([x_j, e_ij, x_i], axis=-1) @ weight.T + bias)
    assert out.shape == (N, out_size)
    assert jnp.allclose(out, ref, atol=1e-5, rtol=1e-5)

    print("KERNEL_OK")
</pallas_src>

<mosaic_0001>
module attributes {stable_mosaic.version = 11 : i64} {
  func.func @gate_kernel(%arg0: i32, %arg1: memref<8x32xf32, #tpu.memory_space<vmem>>, %arg2: memref<8x32xf32, #tpu.memory_space<vmem>>, %arg3: memref<8x32xf32, #tpu.memory_space<vmem>>, %arg4: memref<32x32xf32, #tpu.memory_space<vmem>>, %arg5: memref<32x32xf32, #tpu.memory_space<vmem>>, %arg6: memref<32x32xf32, #tpu.memory_space<vmem>>, %arg7: memref<1x32xf32, #tpu.memory_space<vmem>>, %arg8: memref<8x32xf32, #tpu.memory_space<vmem>>) attributes {dimension_semantics = [#tpu.dimension_semantics<parallel>], iteration_bounds = array<i64: 3>, scalar_prefetch = 0 : i64, scratch_operands = 0 : i64, tpu.core_type = #tpu.core_type<tc>, window_params = [{transform_indices = @transform_0, window_bounds = array<i64: 8, 32>}, {transform_indices = @transform_1, window_bounds = array<i64: 8, 32>}, {transform_indices = @transform_2, window_bounds = array<i64: 8, 32>}, {pipeline_mode = #tpu.pipeline_mode<synchronous>, transform_indices = @transform_3, window_bounds = array<i64: 32, 32>}, {pipeline_mode = #tpu.pipeline_mode<synchronous>, transform_indices = @transform_4, window_bounds = array<i64: 32, 32>}, {pipeline_mode = #tpu.pipeline_mode<synchronous>, transform_indices = @transform_5, window_bounds = array<i64: 32, 32>}, {pipeline_mode = #tpu.pipeline_mode<synchronous>, transform_indices = @transform_6, window_bounds = array<i64: 1, 32>}, {transform_indices = @transform_7, window_bounds = array<i64: 8, 32>}]} {
    %c0 = arith.constant 0 : index
    %c0_0 = arith.constant 0 : index
    %0 = vector.load %arg1[%c0, %c0_0] : memref<8x32xf32, #tpu.memory_space<vmem>>, vector<8x32xf32>
    %c0_1 = arith.constant 0 : index
    %c0_2 = arith.constant 0 : index
    %1 = vector.load %arg4[%c0_1, %c0_2] : memref<32x32xf32, #tpu.memory_space<vmem>>, vector<32x32xf32>
    %cst = arith.constant dense<0.000000e+00> : vector<8x32xf32>
    %2 = tpu.matmul %0, %1, %cst {dimension_numbers = #tpu.dot_dimension_numbers<[1], [1], [0], [0], [0, 0, 1, 0], [], []>} : vector<8x32xf32>, vector<32x32xf32>, vector<8x32xf32> -> vector<8x32xf32>
    %c0_3 = arith.constant 0 : index
    %c0_4 = arith.constant 0 : index
    %3 = vector.load %arg2[%c0_3, %c0_4] : memref<8x32xf32, #tpu.memory_space<vmem>>, vector<8x32xf32>
    %c0_5 = arith.constant 0 : index
    %c0_6 = arith.constant 0 : index
    %4 = vector.load %arg5[%c0_5, %c0_6] : memref<32x32xf32, #tpu.memory_space<vmem>>, vector<32x32xf32>
    %cst_7 = arith.constant dense<0.000000e+00> : vector<8x32xf32>
    %5 = tpu.matmul %3, %4, %cst_7 {dimension_numbers = #tpu.dot_dimension_numbers<[1], [1], [0], [0], [0, 0, 1, 0], [], []>} : vector<8x32xf32>, vector<32x32xf32>, vector<8x32xf32> -> vector<8x32xf32>
    %6 = arith.addf %2, %5 : vector<8x32xf32>
    %c0_8 = arith.constant 0 : index
    %c0_9 = arith.constant 0 : index
    %7 = vector.load %arg3[%c0_8, %c0_9] : memref<8x32xf32, #tpu.memory_space<vmem>>, vector<8x32xf32>
    %c0_10 = arith.constant 0 : index
    %c0_11 = arith.constant 0 : index
    %8 = vector.load %arg6[%c0_10, %c0_11] : memref<32x32xf32, #tpu.memory_space<vmem>>, vector<32x32xf32>
    %cst_12 = arith.constant dense<0.000000e+00> : vector<8x32xf32>
    %9 = tpu.matmul %7, %8, %cst_12 {dimension_numbers = #tpu.dot_dimension_numbers<[1], [1], [0], [0], [0, 0, 1, 0], [], []>} : vector<8x32xf32>, vector<32x32xf32>, vector<8x32xf32> -> vector<8x32xf32>
    %10 = arith.addf %6, %9 : vector<8x32xf32>
    %c0_13 = arith.constant 0 : index
    %c0_14 = arith.constant 0 : index
    %11 = vector.load %arg7[%c0_13, %c0_14] : memref<1x32xf32, #tpu.memory_space<vmem>>, vector<1x32xf32>
    %12 = vector.broadcast %11 : vector<1x32xf32> to vector<8x32xf32>
    %13 = arith.addf %10, %12 : vector<8x32xf32>
    %14 = math.tanh %13 : vector<8x32xf32>
    %c0_15 = arith.constant 0 : index
    %c0_16 = arith.constant 0 : index
    %15 = vector.load %arg8[%c0_15, %c0_16] : memref<8x32xf32, #tpu.memory_space<vmem>>, vector<8x32xf32>
    tpu.vector_store %arg8[%c0_15, %c0_16], %14 {strides = array<i32>} : memref<8x32xf32, #tpu.memory_space<vmem>>, vector<8x32xf32>,
    return
  }
  func.func @transform_0(%arg0: i32) -> (i32, i32) {
    %c0_i32 = arith.constant 0 : i32
    %c0_i32_0 = arith.constant 0 : i32
    return %arg0, %c0_i32 : i32, i32
  }
  func.func @transform_1(%arg0: i32) -> (i32, i32) {
    %c0_i32 = arith.constant 0 : i32
    %c0_i32_0 = arith.constant 0 : i32
    return %arg0, %c0_i32 : i32, i32
  }
  func.func @transform_2(%arg0: i32) -> (i32, i32) {
    %c0_i32 = arith.constant 0 : i32
    %c0_i32_0 = arith.constant 0 : i32
    return %arg0, %c0_i32 : i32, i32
  }
  func.func @transform_3(%arg0: i32) -> (i32, i32) {
    %c0_i32 = arith.constant 0 : i32
    %c0_i32_0 = arith.constant 0 : i32
    %c0_i32_1 = arith.constant 0 : i32
    return %c0_i32, %c0_i32_0 : i32, i32
  }
  func.func @transform_4(%arg0: i32) -> (i32, i32) {
    %c0_i32 = arith.constant 0 : i32
    %c0_i32_0 = arith.constant 0 : i32
    %c0_i32_1 = arith.constant 0 : i32
    return %c0_i32, %c0_i32_0 : i32, i32
  }
  func.func @transform_5(%arg0: i32) -> (i32, i32) {
    %c0_i32 = arith.constant 0 : i32
    %c0_i32_0 = arith.constant 0 : i32
    %c0_i32_1 = arith.constant 0 : i32
    return %c0_i32, %c0_i32_0 : i32, i32
  }
  func.func @transform_6(%arg0: i32) -> (i32, i32) {
    %c0_i32 = arith.constant 0 : i32
    %c0_i32_0 = arith.constant 0 : i32
    %c0_i32_1 = arith.constant 0 : i32
    return %c0_i32, %c0_i32_0 : i32, i32
  }
  func.func @transform_7(%arg0: i32) -> (i32, i32) {
    %c0_i32 = arith.constant 0 : i32
    %c0_i32_0 = arith.constant 0 : i32
    return %arg0, %c0_i32 : i32, i32
  }
}

</mosaic_0001>

<llo_original>
// kernel: tpu_custom_call.1
$region0: #{tpu_custom_call.1}
  #allocation0 [shape = 'u32[]', space=smem, size = 0x4, offset = 0x4, fixed_abs, tag = 'smem constant byte address 0x4 - core index']
  #allocation1 [shape = 'u32[144,128]{1,0:T(1,128)}', space=vmem, size = 0x12000, scoped, tag = 'internal scratch']
  %s0 = inlined_call_operand.hbm [shape: f32[24,32], index: 0, kind: input, shape index: {}]
  %s1 = inlined_call_operand.hbm [shape: f32[24,32], index: 1, kind: input, shape index: {}]
  %s2 = inlined_call_operand.hbm [shape: f32[24,32], index: 2, kind: input, shape index: {}]
  %s3 = inlined_call_operand.hbm [shape: f32[32,32], index: 3, kind: input, shape index: {}]
  %s4 = inlined_call_operand.hbm [shape: f32[32,32], index: 4, kind: input, shape index: {}]
  %s5 = inlined_call_operand.hbm [shape: f32[32,32], index: 5, kind: input, shape index: {}]
  %s6 = inlined_call_operand.vmem [shape: f32[1,32], index: 6, kind: input, shape index: {}]
  %s7 = inlined_call_operand.hbm [shape: f32[24,32], index: 7, kind: output, shape index: {}]
  %s8 = sld [smem:[#allocation0]]
  $region85: #{tpu_custom_call.1} parent=0
    _
  %s10 = ssub.s32 1, %s8
  %s11 = scalar_select 0, %s10, %s8
  $region1: #{tpu_custom_call.1} parent=0
    #allocation2 [shape = 'u8[8192]{0}', space=vmem, size = 0x2000, scoped, tag = 'input window, operand 0']
    #allocation3 [shape = 's32[2]{0}', space=sflag, size = 0x8, scoped, tag = 'scoped memory for tpu_custom_call.1']
    #allocation4 [shape = 's32[2]{0}', space=sflag, size = 0x8, scoped, tag = 'scoped memory for tpu_custom_call.1']
    #allocation5 [shape = 'u8[8192]{0}', space=vmem, size = 0x2000, scoped, tag = 'input window, operand 1']
    #allocation6 [shape = 's32[2]{0}', space=sflag, size = 0x8, scoped, tag = 'scoped memory for tpu_custom_call.1']
    #allocation7 [shape = 'u8[8192]{0}', space=vmem, size = 0x2000, scoped, tag = 'input window, operand 2']
    #allocation8 [shape = 'u8[16384]{0}', space=vmem, size = 0x4000, scoped, tag = 'input window, operand 3, single buffered']
    #allocation9 [shape = 's32[1]{0}', space=sflag, size = 0x4, scoped, tag = 'scoped memory for tpu_custom_call.1']
    #allocation10 [shape = 'u8[16384]{0}', space=vmem, size = 0x4000, scoped, tag = 'input window, operand 4, single buffered']
    #allocation11 [shape = 'u8[16384]{0}', space=vmem, size = 0x4000, scoped, tag = 'input window, operand 5, single buffered']
    #allocation12 [shape = 's32[1]{0}', space=sflag, size = 0x4, scoped, tag = 'scoped memory for tpu_custom_call.1']
    #allocation13 [shape = 'u8[8192]{0}', space=vmem, size = 0x2000, scoped, tag = 'output window, operand 0']
    %12 = vsyncpa [#allocation3], 0
    %s13 = scalar_lea.sflag [#allocation3], 1
    %14 = vsyncpa %s13, 0
    %15 = vsyncpa [#allocation6], 0
    %s16 = scalar_lea.sflag [#allocation6], 1
    %17 = vsyncpa %s16, 0
    %18 = vsyncpa [#allocation9], 0
    %19 = vsyncpa [#allocation12], 0
    %20 = vsyncpa [#allocation4], 0
    %s21 = scalar_lea.sflag [#allocation4], 1
    %22 = vsyncpa %s21, 0
    loop: start=0, step=1, limit=5
    $region2: #{tpu_custom_call.1} parent=1 // loop_pre_header
      _
    $region3: #{tpu_custom_call.1} parent=1 // loop_header
      %s24 = sphi 0, %s28
      %p25 = scmp.ge.s32.totalorder %s24, 5
      %s34 = sphi 0, %s36
      %s37 = sphi 0, %s34
      %s38 = sphi 0, %s37
      %s54 = sphi 0, %s38
      %s60 = sphi 0, %s62
      %s63 = sphi 0, %s60
      %s64 = sphi 0, %s63
      %s80 = sphi 0, %s64
      %s86 = sphi 0, %s88
      %s89 = sphi 0, %s86
      %s90 = sphi 0, %s89
      %s106 = sphi 0, %s90
      %s110 = sphi 0, %s110
      %s112 = sphi 0, %s110
      %s113 = sphi 0, %s112
      %s127 = sphi 0, %s113
      %s131 = sphi 0, %s131
      %s133 = sphi 0, %s131
      %s134 = sphi 0, %s133
      %s148 = sphi 0, %s134
      %s152 = sphi 0, %s152
      %s154 = sphi 0, %s152
      %s155 = sphi 0, %s154
      %s169 = sphi 0, %s155
      %s173 = sphi 0, %s173
      %s175 = sphi 0, %s173
      %s176 = sphi 0, %s175
      %s190 = sphi 0, %s176
      %s196 = sphi 0, %s198
      %s199 = sphi 0, %s196
      %s200 = sphi 0, %s199
      %s216 = sphi 0, %s200
    $region4: #{tpu_custom_call.1} parent=1 // loop_header_branch
      %27 = sbr.rel (%p25) target = $region8
    $region5: #{tpu_custom_call.1} parent=1 // loop_body
      %s29 = ssub.s32 %s24, 1
      %s30 = ssub.s32 %s24, 2
      %s31 = sadd.s32 %s24, 1
      %s32 = ssub.s32 %s24, %s31
      %p33 = scmp.eq.s32.totalorder %s32, 0
      %s35 = sadd.s32 %s34, 1
      %s36 = scalar_select %p33, %s34, %s35
      %p39 = pneg %p33
      %p40 = scmp.eq.s32.totalorder %s24, 2
      %p41 = por %p39, %p40
      %p42 = scmp.ne.s32.totalorder %s34, %s37
      %p43 = scmp.eq.s32.totalorder %s24, 0
      %p44 = por %p42, %p43
      %p45 = scmp.ne.s32.totalorder %s34, %s37
      %p46 = scmp.eq.s32.totalorder %s29, 2
      %p47 = por %p45, %p46
      %p48 = scmp.ne.s32.totalorder %s37, %s38
      %p49 = scmp.eq.s32.totalorder %s29, 0
      %p50 = por %p48, %p49
      %p51 = scmp.ne.s32.totalorder %s37, %s38
      %p52 = scmp.eq.s32.totalorder %s30, 2
      %p53 = por %p51, %p52
      %p55 = scmp.ne.s32.totalorder %s38, %s54
      %p56 = scmp.eq.s32.totalorder %s30, 0
      %p57 = por %p55, %p56
      %s58 = ssub.s32 %s24, %s31
      %p59 = scmp.eq.s32.totalorder %s58, 0
      %s61 = sadd.s32 %s60, 1
      %s62 = scalar_select %p59, %s60, %s61
      %p65 = pneg %p59
      %p66 = scmp.eq.s32.totalorder %s24, 2
      %p67 = por %p65, %p66
      %p68 = scmp.ne.s32.totalorder %s60, %s63
      %p69 = scmp.eq.s32.totalorder %s24, 0
      %p70 = por %p68, %p69
      %p71 = scmp.ne.s32.totalorder %s60, %s63
      %p72 = scmp.eq.s32.totalorder %s29, 2
      %p73 = por %p71, %p72
      %p74 = scmp.ne.s32.totalorder %s63, %s64
      %p75 = scmp.eq.s32.totalorder %s29, 0
      %p76 = por %p74, %p75
      %p77 = scmp.ne.s32.totalorder %s63, %s64
      %p78 = scmp.eq.s32.totalorder %s30, 2
      %p79 = por %p77, %p78
      %p81 = scmp.ne.s32.totalorder %s64, %s80
      %p82 = scmp.eq.s32.totalorder %s30, 0
      %p83 = por %p81, %p82
      %s84 = ssub.s32 %s24, %s31
      %p85 = scmp.eq.s32.totalorder %s84, 0
      %s87 = sadd.s32 %s86, 1
      %s88 = scalar_select %p85, %s86, %s87
      %p91 = pneg %p85
      %p92 = scmp.eq.s32.totalorder %s24, 2
      %p93 = por %p91, %p92
      %p94 = scmp.ne.s32.totalorder %s86, %s89
      %p95 = scmp.eq.s32.totalorder %s24, 0
      %p96 = por %p94, %p95
      %p97 = scmp.ne.s32.totalorder %s86, %s89
      %p98 = scmp.eq.s32.totalorder %s29, 2
      %p99 = por %p97, %p98
      %p100 = scmp.ne.s32.totalorder %s89, %s90
      %p101 = scmp.eq.s32.totalorder %s29, 0
      %p102 = por %p100, %p101
      %p103 = scmp.ne.s32.totalorder %s89, %s90
      %p104 = scmp.eq.s32.totalorder %s30, 2
      %p105 = por %p103, %p104
      %p107 = scmp.ne.s32.totalorder %s90, %s106
      %p108 = scmp.eq.s32.totalorder %s30, 0
      %p109 = por %p107, %p108
      %s111 = sadd.s32 %s110, 1
      %p114 = scmp.eq.s32.totalorder %s24, 2
      %p115 = scmp.ne.s32.totalorder %s110, %s112
      %p116 = scmp.eq.s32.totalorder %s24, 0
      %p117 = por %p115, %p116
      %p118 = scmp.ne.s32.totalorder %s110, %s112
      %p119 = scmp.eq.s32.totalorder %s29, 2
      %p120 = por %p118, %p119
      %p121 = scmp.ne.s32.totalorder %s112, %s113
      %p122 = scmp.eq.s32.totalorder %s29, 0
      %p123 = por %p121, %p122
      %p124 = scmp.ne.s32.totalorder %s112, %s113
      %p125 = scmp.eq.s32.totalorder %s30, 2
      %p126 = por %p124, %p125
      %p128 = scmp.ne.s32.totalorder %s113, %s127
      %p129 = scmp.eq.s32.totalorder %s30, 0
      %p130 = por %p128, %p129
      %s132 = sadd.s32 %s131, 1
      %p135 = scmp.eq.s32.totalorder %s24, 2
      %p136 = scmp.ne.s32.totalorder %s131, %s133
      %p137 = scmp.eq.s32.totalorder %s24, 0
      %p138 = por %p136, %p137
      %p139 = scmp.ne.s32.totalorder %s131, %s133
      %p140 = scmp.eq.s32.totalorder %s29, 2
      %p141 = por %p139, %p140
      %p142 = scmp.ne.s32.totalorder %s133, %s134
      %p143 = scmp.eq.s32.totalorder %s29, 0
      %p144 = por %p142, %p143
      %p145 = scmp.ne.s32.totalorder %s133, %s134
      %p146 = scmp.eq.s32.totalorder %s30, 2
      %p147 = por %p145, %p146
      %p149 = scmp.ne.s32.totalorder %s134, %s148
      %p150 = scmp.eq.s32.totalorder %s30, 0
      %p151 = por %p149, %p150
      %s153 = sadd.s32 %s152, 1
      %p156 = scmp.eq.s32.totalorder %s24, 2
      %p157 = scmp.ne.s32.totalorder %s152, %s154
      %p158 = scmp.eq.s32.totalorder %s24, 0
      %p159 = por %p157, %p158
      %p160 = scmp.ne.s32.totalorder %s152, %s154
      %p161 = scmp.eq.s32.totalorder %s29, 2
      %p162 = por %p160, %p161
      %p163 = scmp.ne.s32.totalorder %s154, %s155
      %p164 = scmp.eq.s32.totalorder %s29, 0
      %p165 = por %p163, %p164
      %p166 = scmp.ne.s32.totalorder %s154, %s155
      %p167 = scmp.eq.s32.totalorder %s30, 2
      %p168 = por %p166, %p167
      %p170 = scmp.ne.s32.totalorder %s155, %s169
      %p171 = scmp.eq.s32.totalorder %s30, 0
      %p172 = por %p170, %p171
      %s174 = sadd.s32 %s173, 1
      %p177 = scmp.eq.s32.totalorder %s24, 2
      %p178 = scmp.ne.s32.totalorder %s173, %s175
      %p179 = scmp.eq.s32.totalorder %s24, 0
      %p180 = por %p178, %p179
      %p181 = scmp.ne.s32.totalorder %s173, %s175
      %p182 = scmp.eq.s32.totalorder %s29, 2
      %p183 = por %p181, %p182
      %p184 = scmp.ne.s32.totalorder %s175, %s176
      %p185 = scmp.eq.s32.totalorder %s29, 0
      %p186 = por %p184, %p185
      %p187 = scmp.ne.s32.totalorder %s175, %s176
      %p188 = scmp.eq.s32.totalorder %s30, 2
      %p189 = por %p187, %p188
      %p191 = scmp.ne.s32.totalorder %s176, %s190
      %p192 = scmp.eq.s32.totalorder %s30, 0
      %p193 = por %p191, %p192
      %s194 = ssub.s32 %s24, %s31
      %p195 = scmp.eq.s32.totalorder %s194, 0
      %s197 = sadd.s32 %s196, 1
      %s198 = scalar_select %p195, %s196, %s197
      %p201 = pneg %p195
      %p202 = scmp.eq.s32.totalorder %s24, 2
      %p203 = por %p201, %p202
      %p204 = scmp.ne.s32.totalorder %s196, %s199
      %p205 = scmp.eq.s32.totalorder %s24, 0
      %p206 = por %p204, %p205
      %p207 = scmp.ne.s32.totalorder %s196, %s199
      %p208 = scmp.eq.s32.totalorder %s29, 2
      %p209 = por %p207, %p208
      %p210 = scmp.ne.s32.totalorder %s199, %s200
      %p211 = scmp.eq.s32.totalorder %s29, 0
      %p212 = por %p210, %p211
      %p213 = scmp.ne.s32.totalorder %s199, %s200
      %p214 = scmp.eq.s32.totalorder %s30, 2
      %p215 = por %p213, %p214
      %p217 = scmp.ne.s32.totalorder %s200, %s216
      %p218 = scmp.eq.s32.totalorder %s30, 0
      %p219 = por %p217, %p218
      %p220 = scmp.le.s32.totalorder 1, %s24
      %p221 = scmp.lt.s32.totalorder %s24, 4
      %p222 = pnand %p220, %p221
      %p223 = pneg %p222
      // Predicated region
      $region9: #{tpu_custom_call.1} parent=5 // pred_check
        _
      $region10: #{tpu_custom_call.1} parent=5 // pred_check_branch
        %225 = sbr.rel (%p222) target = $region12
      $region11: #{tpu_custom_call.1} parent=5 // pred_region
        %s226 = ssub.s32 %s24, 1
        // Predicated region
        $region13: #{tpu_custom_call.1} parent=11 // pred_check
          %p227 = pneg %p123
        $region14: #{tpu_custom_call.1} parent=11 // pred_check_branch
          %229 = sbr.rel (%p227) target = $region16
        $region15: #{tpu_custom_call.1} parent=11 // pred_region
          %s231 = ssub.s32 512, 512
          %232 = vsyncadd [#allocation9], %s231
          %s233 = sshll.u32 [#allocation8], 4
          %s234 = int_to_ptr.vmem [resolvable:$true] %s233
          %239 = dma.hbm_to_vmem [thread:$0]  %s3, 512, %s234, [#allocation9], 128, 128, 8
        $region16: #{tpu_custom_call.1} parent=11 // pred_fallthru
          _
        // Predicated region
        $region17: #{tpu_custom_call.1} parent=11 // pred_check
          %p240 = pneg %p144
        $region18: #{tpu_custom_call.1} parent=11 // pred_check_branch
          %242 = sbr.rel (%p240) target = $region20
        $region19: #{tpu_custom_call.1} parent=11 // pred_region
          %s244 = ssub.s32 512, 512
          %245 = vsyncadd [#allocation9], %s244
          %s246 = sshll.u32 [#allocation10], 4
          %s247 = int_to_ptr.vmem [resolvable:$true] %s246
          %252 = dma.hbm_to_vmem [thread:$0]  %s4, 512, %s247, [#allocation9], 128, 128, 8
        $region20: #{tpu_custom_call.1} parent=11 // pred_fallthru
          _
        // Predicated region
        $region21: #{tpu_custom_call.1} parent=11 // pred_check
          %p253 = pneg %p165
        $region22: #{tpu_custom_call.1} parent=11 // pred_check_branch
          %255 = sbr.rel (%p253) target = $region24
        $region23: #{tpu_custom_call.1} parent=11 // pred_region
          %s257 = ssub.s32 512, 512
          %258 = vsyncadd [#allocation12], %s257
          %s259 = sshll.u32 [#allocation11], 4
          %s260 = int_to_ptr.vmem [resolvable:$true] %s259
          %265 = dma.hbm_to_vmem [thread:$0]  %s5, 512, %s260, [#allocation12], 128, 128, 8
        $region24: #{tpu_custom_call.1} parent=11 // pred_fallthru
          _
        // Predicated region
        $region25: #{tpu_custom_call.1} parent=11 // pred_check
          %p266 = pneg %p186
        $region26: #{tpu_custom_call.1} parent=11 // pred_check_branch
          %268 = sbr.rel (%p266) target = $region28
        $region27: #{tpu_custom_call.1} parent=11 // pred_region
          _
        $region28: #{tpu_custom_call.1} parent=11 // pred_fallthru
          _
      $region12: #{tpu_custom_call.1} parent=5 // pred_fallthru
        _
      %p269 = scmp.lt.s32.totalorder %s24, 3
      // Predicated region
      $region29: #{tpu_custom_call.1} parent=5 // pred_check
        %p270 = pneg %p269
      $region30: #{tpu_custom_call.1} parent=5 // pred_check_branch
        %272 = sbr.rel (%p270) target = $region32
      $region31: #{tpu_custom_call.1} parent=5 // pred_region
        // Predicated region
        $region33: #{tpu_custom_call.1} parent=31 // pred_check
          %p273 = pneg %p44
        $region34: #{tpu_custom_call.1} parent=31 // pred_check_branch
          %275 = sbr.rel (%p273) target = $region36
        $region35: #{tpu_custom_call.1} parent=31 // pred_region
          %s276 = sand.u32 %s34, 1
          %s277 = scalar_lea.sflag [#allocation3], %s276
          %s278 = sand.u32 %s34, 1
          %s279 = smul.addr %s278, 8
          %s280 = scalar_lea.vmem [#allocation2], %s279
          %s282 = ssub.s32 128, 128
          %283 = vsyncadd %s277, %s282
          %s284 = smul.addr %s24, 128
          %s285 = scalar_lea.hbm %s0, %s284
          %s287 = sshll.u32 %s280, 4
          %s288 = int_to_ptr.vmem [resolvable:$true] %s287
          %290 = dma.hbm_to_vmem [thread:$0]  %s285, 128, %s288, %s277
        $region36: #{tpu_custom_call.1} parent=31 // pred_fallthru
          _
        // Predicated region
        $region37: #{tpu_custom_call.1} parent=31 // pred_check
          %p291 = pneg %p70
        $region38: #{tpu_custom_call.1} parent=31 // pred_check_branch
          %293 = sbr.rel (%p291) target = $region40
        $region39: #{tpu_custom_call.1} parent=31 // pred_region
          %s294 = sand.u32 %s24, 1
          %s295 = scalar_lea.sflag [#allocation6], %s294
          %s296 = sand.u32 %s60, 1
          %s297 = smul.addr %s296, 8
          %s298 = scalar_lea.vmem [#allocation5], %s297
          %s300 = ssub.s32 128, 128
          %301 = vsyncadd %s295, %s300
          %s302 = smul.addr %s24, 128
          %s303 = scalar_lea.hbm %s1, %s302
          %s305 = sshll.u32 %s298, 4
          %s306 = int_to_ptr.vmem [resolvable:$true] %s305
          %308 = dma.hbm_to_vmem [thread:$0]  %s303, 128, %s306, %s295
        $region40: #{tpu_custom_call.1} parent=31 // pred_fallthru
          _
        // Predicated region
        $region41: #{tpu_custom_call.1} parent=31 // pred_check
          %p309 = pneg %p96
        $region42: #{tpu_custom_call.1} parent=31 // pred_check_branch
          %311 = sbr.rel (%p309) target = $region44
        $region43: #{tpu_custom_call.1} parent=31 // pred_region
          %s312 = sand.u32 %s24, 1
          %s313 = scalar_lea.sflag [#allocation6], %s312
          %s314 = sand.u32 %s86, 1
          %s315 = smul.addr %s314, 8
          %s316 = scalar_lea.vmem [#allocation7], %s315
          %s318 = ssub.s32 128, 128
          %319 = vsyncadd %s313, %s318
          %s320 = smul.addr %s24, 128
          %s321 = scalar_lea.hbm %s2, %s320
          %s323 = sshll.u32 %s316, 4
          %s324 = int_to_ptr.vmem [resolvable:$true] %s323
          %326 = dma.hbm_to_vmem [thread:$0]  %s321, 128, %s324, %s313
        $region44: #{tpu_custom_call.1} parent=31 // pred_fallthru
          _
      $region32: #{tpu_custom_call.1} parent=5 // pred_fallthru
        _
      %p327 = scmp.le.s32.totalorder 1, %s24
      %p328 = scmp.lt.s32.totalorder %s24, 4
      %p329 = pnand %p327, %p328
      %p330 = pneg %p329
      // Predicated region
      $region45: #{tpu_custom_call.1} parent=5 // pred_check
        _
      $region46: #{tpu_custom_call.1} parent=5 // pred_check_branch
        %332 = sbr.rel (%p329) target = $region48
      $region47: #{tpu_custom_call.1} parent=5 // pred_region
        %s333 = ssub.s32 %s24, 1
        %s334 = sand.u32 %s37, 1
        %s335 = scalar_lea.sflag [#allocation3], %s334
        %s336 = sand.u32 %s37, 1
        %s337 = smul.addr %s336, 8
        %s338 = scalar_lea.vmem [#allocation2], %s337
        // Predicated region
        $region49: #{tpu_custom_call.1} parent=47 // pred_check
          %p339 = pneg %p50
        $region50: #{tpu_custom_call.1} parent=47 // pred_check_branch
          %341 = sbr.rel (%p339) target = $region52
        $region51: #{tpu_custom_call.1} parent=47 // pred_region
          %342 = dma.done %s335, 128
        $region52: #{tpu_custom_call.1} parent=47 // pred_fallthru
          _
        %s343 = sand.u32 %s29, 1
        %s344 = scalar_lea.sflag [#allocation6], %s343
        %s345 = sand.u32 %s63, 1
        %s346 = smul.addr %s345, 8
        %s347 = scalar_lea.vmem [#allocation5], %s346
        // Predicated region
        $region53: #{tpu_custom_call.1} parent=47 // pred_check
          %p348 = pneg %p76
        $region54: #{tpu_custom_call.1} parent=47 // pred_check_branch
          %350 = sbr.rel (%p348) target = $region56
        $region55: #{tpu_custom_call.1} parent=47 // pred_region
          %351 = dma.done %s344, 128
        $region56: #{tpu_custom_call.1} parent=47 // pred_fallthru
          _
        %s352 = sand.u32 %s29, 1
        %s353 = scalar_lea.sflag [#allocation6], %s352
        %s354 = sand.u32 %s89, 1
        %s355 = smul.addr %s354, 8
        %s356 = scalar_lea.vmem [#allocation7], %s355
        // Predicated region
        $region57: #{tpu_custom_call.1} parent=47 // pred_check
          %p357 = pneg %p102
        $region58: #{tpu_custom_call.1} parent=47 // pred_check_branch
          %359 = sbr.rel (%p357) target = $region60
        $region59: #{tpu_custom_call.1} parent=47 // pred_region
          %360 = dma.done %s353, 128
        $region60: #{tpu_custom_call.1} parent=47 // pred_fallthru
          _
        // Predicated region
        $region61: #{tpu_custom_call.1} parent=47 // pred_check
          %p361 = pneg %p123
        $region62: #{tpu_custom_call.1} parent=47 // pred_check_branch
          %363 = sbr.rel (%p361) target = $region64
        $region63: #{tpu_custom_call.1} parent=47 // pred_region
          %364 = dma.done [#allocation9], 512
        $region64: #{tpu_custom_call.1} parent=47 // pred_fallthru
          _
        // Predicated region
        $region65: #{tpu_custom_call.1} parent=47 // pred_check
          %p365 = pneg %p144
        $region66: #{tpu_custom_call.1} parent=47 // pred_check_branch
          %367 = sbr.rel (%p365) target = $region68
        $region67: #{tpu_custom_call.1} parent=47 // pred_region
          %368 = dma.done [#allocation9], 512
        $region68: #{tpu_custom_call.1} parent=47 // pred_fallthru
          _
        // Predicated region
        $region69: #{tpu_custom_call.1} parent=47 // pred_check
          %p369 = pneg %p165
        $region70: #{tpu_custom_call.1} parent=47 // pred_check_branch
          %371 = sbr.rel (%p369) target = $region72
        $region71: #{tpu_custom_call.1} parent=47 // pred_region
          %372 = dma.done [#allocation12], 512
        $region72: #{tpu_custom_call.1} parent=47 // pred_fallthru
          _
        %s373 = sand.u32 %s37, 1
        %s374 = scalar_lea.sflag [#allocation3], %s373
        %s375 = sand.u32 %s37, 1
        %s376 = smul.addr %s375, 8
        %s377 = scalar_lea.vmem [#allocation2], %s376
        %p378 = pneg %p50
        %p379 = pneg %p47
        %s380 = sand.u32 %s29, 1
        %s381 = scalar_lea.sflag [#allocation6], %s380
        %s382 = sand.u32 %s63, 1
        %s383 = smul.addr %s382, 8
        %s384 = scalar_lea.vmem [#allocation5], %s383
        %p385 = pneg %p76
        %p386 = pneg %p73
        %s387 = sand.u32 %s29, 1
        %s388 = scalar_lea.sflag [#allocation6], %s387
        %s389 = sand.u32 %s89, 1
        %s390 = smul.addr %s389, 8
        %s391 = scalar_lea.vmem [#allocation7], %s390
        %p392 = pneg %p102
        %p393 = pneg %p99
        %p394 = pneg %p123
        %p395 = pneg %p120
        %p396 = pneg %p144
        %p397 = pneg %p141
        %p398 = pneg %p165
        %p399 = pneg %p162
        %p400 = pneg %p186
        %p401 = pneg %p183
        %p402 = pneg %p212
        %p403 = pneg %p209
        %s404 = sand.u32 %s199, 1
        %s405 = scalar_lea.sflag [#allocation4], %s404
        %s406 = sand.u32 %s199, 1
        %s407 = smul.addr %s406, 8
        %s408 = scalar_lea.vmem [#allocation13], %s407
        %v409 = vld [vmem:[%s338] sm:$0xff]
        %v410 = vld [vmem:[#allocation8] sm:$0xff]
        %v411 = vld [vmem:[#allocation8 + $0x8] sm:$0xff]
        %v412 = vld [vmem:[#allocation8 + $0x10] sm:$0xff]
        %v413 = vld [vmem:[#allocation8 + $0x18] sm:$0xff]
        %v414 = vld [vmem:[%s347] sm:$0xff]
        %v415 = vld [vmem:[#allocation10] sm:$0xff]
        %v416 = vld [vmem:[#allocation10 + $0x8] sm:$0xff]
        %v417 = vld [vmem:[#allocation10 + $0x10] sm:$0xff]
        %v418 = vld [vmem:[#allocation10 + $0x18] sm:$0xff]
        %vm419 = vcmask 261120
        %v421 = vsel %vm419, %v414, 0
        %v424 = vsel %vm419, %v415, 0
        %v427 = vsel %vm419, %v416, 0
        %v430 = vsel %vm419, %v417, 0
        %v433 = vsel %vm419, %v418, 0
        %435 = vmatprep.subr.mxu0 0.0
        %436 = vmatpush1.xpose.msra.mxu0 %v424
        %437 = vmatprep.subr.mxu0 0.0
        %438 = vmatpush1.xpose.msra.mxu0 %v427
        %439 = vmatprep.subr.mxu0 0.0
        %440 = vmatpush1.xpose.msra.mxu0 %v430
        %441 = vmatprep.subr.mxu0 0.0
        %442 = vmatpush1.xpose.msra.mxu0 %v433
        %443 = vmatprep.subr.mxu0 0.0
        %444 = vmatpush1.xpose.msra.mxu0 0.0
        %445 = vmatprep.subr.mxu0 0.0
        %446 = vmatpush1.xpose.msra.mxu0 0.0
        %447 = vmatprep.subr.mxu0 0.0
        %448 = vmatpush1.xpose.msra.mxu0 0.0
        %449 = vmatprep.subr.mxu0 0.0
        %450 = vmatpush1.xpose.msra.mxu0 0.0
        %451 = vmatprep.subr.mxu0 0.0
        %452 = vmatpush1.xpose.msra.mxu0 0.0
        %453 = vmatprep.subr.mxu0 0.0
        %454 = vmatpush1.xpose.msra.mxu0 0.0
        %455 = vmatprep.subr.mxu0 0.0
        %456 = vmatpush1.xpose.msra.mxu0 0.0
        %457 = vmatprep.subr.mxu0 0.0
        %458 = vmatpush1.xpose.msra.mxu0 0.0
        %459 = vmatprep.subr.mxu0 0.0
        %460 = vmatpush1.xpose.msra.mxu0 0.0
        %461 = vmatprep.subr.mxu0 0.0
        %462 = vmatpush1.xpose.msra.mxu0 0.0
        %463 = vmatprep.subr.mxu0 0.0
        %464 = vmatpush1.xpose.msra.mxu0 0.0
        %465 = vmatprep.subr.mxu0 0.0
        %466 = vmatpush1.xpose.msra.mxu0 0.0
        %467 = vmatprep.subr.mxu0 0.0
        %468 = vmatpush1.xpose.msra.mxu0 0.0
        %469 = vmatprep.subr.mxu0 0.0
        %470 = vmatpush1.xpose.msra.mxu0 0.0
        %471 = vmatprep.subr.mxu0 0.0
        %472 = vmatpush1.xpose.msra.mxu0 0.0
        %473 = vmatprep.subr.mxu0 0.0
        %474 = vmatpush1.xpose.msra.mxu0 0.0
        %475 = vmatprep.subr.mxu0 0.0
        %476 = vmatpush1.xpose.msra.mxu0 0.0
        %477 = vmatprep.subr.mxu0 0.0
        %478 = vmatpush1.xpose.msra.mxu0 0.0
        %479 = vmatprep.subr.mxu0 0.0
        %480 = vmatpush1.xpose.msra.mxu0 0.0
        %481 = vmatprep.subr.mxu0 0.0
        %482 = vmatpush1.xpose.msra.mxu0 0.0
        %483 = vmatprep.subr.mxu0 0.0
        %484 = vmatpush1.xpose.msra.mxu0 0.0
        %485 = vmatprep.subr.mxu0 0.0
        %486 = vmatpush1.xpose.msra.mxu0 0.0
        %487 = vmatprep.subr.mxu0 0.0
        %488 = vmatpush1.xpose.msra.mxu0 0.0
        %489 = vmatprep.subr.mxu0 0.0
        %490 = vmatpush1.xpose.msra.mxu0 0.0
        %491 = vmatprep.subr.mxu0 0.0
        %492 = vmatpush1.xpose.msra.mxu0 0.0
        %493 = vmatprep.subr.mxu0 0.0
        %494 = vmatpush1.xpose.msra.mxu0 0.0
        %495 = vmatprep.subr.mxu0 0.0
        %496 = vmatpush1.xpose.msra.mxu0 0.0
        %497 = vmatprep.subr.mxu0 0.0
        %498 = vmatpush1.xpose.msra.mxu0 0.0
        %499 = vmatprep.mubr.f32.mxu0 0.0
        %500 = vmatmul.mubr.f32.gmra.mrb[0].mxu0 %v421
        %v501 = vpop.f32.mrb[0].mxu0
        %v502 = vadd.f32 0.0, %v501
        %v503 = vpop.f32.mrb[0].mxu0
        %504 = vdwg.mxu0
        %v506 = vsel %vm419, %v409, 0
        %v509 = vsel %vm419, %v410, 0
        %v512 = vsel %vm419, %v411, 0
        %v515 = vsel %vm419, %v412, 0
        %v518 = vsel %vm419, %v413, 0
        %520 = vmatprep.subr.mxu0 0.0
        %521 = vmatpush1.xpose.msra.mxu0 %v509
        %522 = vmatprep.subr.mxu0 0.0
        %523 = vmatpush1.xpose.msra.mxu0 %v512
        %524 = vmatprep.subr.mxu0 0.0
        %525 = vmatpush1.xpose.msra.mxu0 %v515
        %526 = vmatprep.subr.mxu0 0.0
        %527 = vmatpush1.xpose.msra.mxu0 %v518
        %528 = vmatprep.subr.mxu0 0.0
        %529 = vmatpush1.xpose.msra.mxu0 0.0
        %530 = vmatprep.subr.mxu0 0.0
        %531 = vmatpush1.xpose.msra.mxu0 0.0
        %532 = vmatprep.subr.mxu0 0.0
        %533 = vmatpush1.xpose.msra.mxu0 0.0
        %534 = vmatprep.subr.mxu0 0.0
        %535 = vmatpush1.xpose.msra.mxu0 0.0
        %536 = vmatprep.subr.mxu0 0.0
        %537 = vmatpush1.xpose.msra.mxu0 0.0
        %538 = vmatprep.subr.mxu0 0.0
        %539 = vmatpush1.xpose.msra.mxu0 0.0
        %540 = vmatprep.subr.mxu0 0.0
        %541 = vmatpush1.xpose.msra.mxu0 0.0
        %542 = vmatprep.subr.mxu0 0.0
        %543 = vmatpush1.xpose.msra.mxu0 0.0
        %544 = vmatprep.subr.mxu0 0.0
        %545 = vmatpush1.xpose.msra.mxu0 0.0
        %546 = vmatprep.subr.mxu0 0.0
        %547 = vmatpush1.xpose.msra.mxu0 0.0
        %548 = vmatprep.subr.mxu0 0.0
        %549 = vmatpush1.xpose.msra.mxu0 0.0
        %550 = vmatprep.subr.mxu0 0.0
        %551 = vmatpush1.xpose.msra.mxu0 0.0
        %552 = vmatprep.subr.mxu0 0.0
        %553 = vmatpush1.xpose.msra.mxu0 0.0
        %554 = vmatprep.subr.mxu0 0.0
        %555 = vmatpush1.xpose.msra.mxu0 0.0
        %556 = vmatprep.subr.mxu0 0.0
        %557 = vmatpush1.xpose.msra.mxu0 0.0
        %558 = vmatprep.subr.mxu0 0.0
        %559 = vmatpush1.xpose.msra.mxu0 0.0
        %560 = vmatprep.subr.mxu0 0.0
        %561 = vmatpush1.xpose.msra.mxu0 0.0
        %562 = vmatprep.subr.mxu0 0.0
        %563 = vmatpush1.xpose.msra.mxu0 0.0
        %564 = vmatprep.subr.mxu0 0.0
        %565 = vmatpush1.xpose.msra.mxu0 0.0
        %566 = vmatprep.subr.mxu0 0.0
        %567 = vmatpush1.xpose.msra.mxu0 0.0
        %568 = vmatprep.subr.mxu0 0.0
        %569 = vmatpush1.xpose.msra.mxu0 0.0
        %570 = vmatprep.subr.mxu0 0.0
        %571 = vmatpush1.xpose.msra.mxu0 0.0
        %572 = vmatprep.subr.mxu0 0.0
        %573 = vmatpush1.xpose.msra.mxu0 0.0
        %574 = vmatprep.subr.mxu0 0.0
        %575 = vmatpush1.xpose.msra.mxu0 0.0
        %576 = vmatprep.subr.mxu0 0.0
        %577 = vmatpush1.xpose.msra.mxu0 0.0
        %578 = vmatprep.subr.mxu0 0.0
        %579 = vmatpush1.xpose.msra.mxu0 0.0
        %580 = vmatprep.subr.mxu0 0.0
        %581 = vmatpush1.xpose.msra.mxu0 0.0
        %582 = vmatprep.subr.mxu0 0.0
        %583 = vmatpush1.xpose.msra.mxu0 0.0
        %584 = vmatprep.mubr.f32.mxu0 0.0
        %585 = vmatmul.mubr.f32.gmra.mrb[0].mxu0 %v506
        %v586 = vpop.f32.mrb[0].mxu0
        %v587 = vadd.f32 %v502, %v586
        %v588 = vpop.f32.mrb[0].mxu0
        %589 = vdwg.mxu0
        %v590 = vld [vmem:[%s356] sm:$0xff]
        %v591 = vld [vmem:[#allocation11] sm:$0xff]
        %v592 = vld [vmem:[#allocation11 + $0x8] sm:$0xff]
        %v593 = vld [vmem:[#allocation11 + $0x10] sm:$0xff]
        %v594 = vld [vmem:[#allocation11 + $0x18] sm:$0xff]
        %v596 = vsel %vm419, %v590, 0
        %v599 = vsel %vm419, %v591, 0
        %v602 = vsel %vm419, %v592, 0
        %v605 = vsel %vm419, %v593, 0
        %v608 = vsel %vm419, %v594, 0
        %610 = vmatprep.subr.mxu0 0.0
        %611 = vmatpush1.xpose.msra.mxu0 %v599
        %612 = vmatprep.subr.mxu0 0.0
        %613 = vmatpush1.xpose.msra.mxu0 %v602
        %614 = vmatprep.subr.mxu0 0.0
        %615 = vmatpush1.xpose.msra.mxu0 %v605
        %616 = vmatprep.subr.mxu0 0.0
        %617 = vmatpush1.xpose.msra.mxu0 %v608
        %618 = vmatprep.subr.mxu0 0.0
        %619 = vmatpush1.xpose.msra.mxu0 0.0
        %620 = vmatprep.subr.mxu0 0.0
        %621 = vmatpush1.xpose.msra.mxu0 0.0
        %622 = vmatprep.subr.mxu0 0.0
        %623 = vmatpush1.xpose.msra.mxu0 0.0
        %624 = vmatprep.subr.mxu0 0.0
        %625 = vmatpush1.xpose.msra.mxu0 0.0
        %626 = vmatprep.subr.mxu0 0.0
        %627 = vmatpush1.xpose.msra.mxu0 0.0
        %628 = vmatprep.subr.mxu0 0.0
        %629 = vmatpush1.xpose.msra.mxu0 0.0
        %630 = vmatprep.subr.mxu0 0.0
        %631 = vmatpush1.xpose.msra.mxu0 0.0
        %632 = vmatprep.subr.mxu0 0.0
        %633 = vmatpush1.xpose.msra.mxu0 0.0
        %634 = vmatprep.subr.mxu0 0.0
        %635 = vmatpush1.xpose.msra.mxu0 0.0
        %636 = vmatprep.subr.mxu0 0.0
        %637 = vmatpush1.xpose.msra.mxu0 0.0
        %638 = vmatprep.subr.mxu0 0.0
        %639 = vmatpush1.xpose.msra.mxu0 0.0
        %640 = vmatprep.subr.mxu0 0.0
        %641 = vmatpush1.xpose.msra.mxu0 0.0
        %642 = vmatprep.subr.mxu0 0.0
        %643 = vmatpush1.xpose.msra.mxu0 0.0
        %644 = vmatprep.subr.mxu0 0.0
        %645 = vmatpush1.xpose.msra.mxu0 0.0
        %646 = vmatprep.subr.mxu0 0.0
        %647 = vmatpush1.xpose.msra.mxu0 0.0
        %648 = vmatprep.subr.mxu0 0.0
        %649 = vmatpush1.xpose.msra.mxu0 0.0
        %650 = vmatprep.subr.mxu0 0.0
        %651 = vmatpush1.xpose.msra.mxu0 0.0
        %652 = vmatprep.subr.mxu0 0.0
        %653 = vmatpush1.xpose.msra.mxu0 0.0
        %654 = vmatprep.subr.mxu0 0.0
        %655 = vmatpush1.xpose.msra.mxu0 0.0
        %656 = vmatprep.subr.mxu0 0.0
        %657 = vmatpush1.xpose.msra.mxu0 0.0
        %658 = vmatprep.subr.mxu0 0.0
        %659 = vmatpush1.xpose.msra.mxu0 0.0
        %660 = vmatprep.subr.mxu0 0.0
        %661 = vmatpush1.xpose.msra.mxu0 0.0
        %662 = vmatprep.subr.mxu0 0.0
        %663 = vmatpush1.xpose.msra.mxu0 0.0
        %664 = vmatprep.subr.mxu0 0.0
        %665 = vmatpush1.xpose.msra.mxu0 0.0
        %666 = vmatprep.subr.mxu0 0.0
        %667 = vmatpush1.xpose.msra.mxu0 0.0
        %668 = vmatprep.subr.mxu0 0.0
        %669 = vmatpush1.xpose.msra.mxu0 0.0
        %670 = vmatprep.subr.mxu0 0.0
        %671 = vmatpush1.xpose.msra.mxu0 0.0
        %672 = vmatprep.subr.mxu0 0.0
        %673 = vmatpush1.xpose.msra.mxu0 0.0
        %674 = vmatprep.mubr.f32.mxu0 0.0
        %675 = vmatmul.mubr.f32.gmra.mrb[0].mxu0 %v596
        %v676 = vpop.f32.mrb[0].mxu0
        %v677 = vadd.f32 0.0, %v676
        %v678 = vpop.f32.mrb[0].mxu0
        %679 = vdwg.mxu0
        %v680 = vadd.f32 %v587, %v677
        %v681 = vld [vmem:[%s6] sm:$0x1]
        %v683 = vlaneseq
        %v684 = vshrl.u32 %v683, 7
        %v685 = vsub.s32 0, %v684
        %v686 = vrot.slane %v681, %v685
        %v688 = vadd.f32 %v680, %v686
        %v689 = vtanh.pop %v688
        %690 = vst.msk [vmem:[%s408] sm:$0xff] %vm419, %v689
        %s691 = sand.u32 %s199, 1
        %s692 = scalar_lea.sflag [#allocation4], %s691
        %s693 = sand.u32 %s199, 1
        %s694 = smul.addr %s693, 8
        %s695 = scalar_lea.vmem [#allocation13], %s694
        // Predicated region
        $region73: #{tpu_custom_call.1} parent=47 // pred_check
          %p696 = pneg %p209
        $region74: #{tpu_custom_call.1} parent=47 // pred_check_branch
          %698 = sbr.rel (%p696) target = $region76
        $region75: #{tpu_custom_call.1} parent=47 // pred_region
          %s700 = ssub.s32 128, 128
          %701 = vsyncadd %s692, %s700
          %s702 = smul.addr %s29, 128
          %s703 = scalar_lea.hbm %s7, %s702
          %s705 = sshll.u32 %s695, 4
          %s706 = int_to_ptr.vmem [resolvable:$true] %s705
          %708 = dma.vmem_to_hbm [thread:$0]  %s706, 128, %s703, %s692
        $region76: #{tpu_custom_call.1} parent=47 // pred_fallthru
          _
      $region48: #{tpu_custom_call.1} parent=5 // pred_fallthru
        _
      %p709 = scmp.le.s32.totalorder 2, %s24
      // Predicated region
      $region77: #{tpu_custom_call.1} parent=5 // pred_check
        %p710 = pneg %p709
      $region78: #{tpu_custom_call.1} parent=5 // pred_check_branch
        %712 = sbr.rel (%p710) target = $region80
      $region79: #{tpu_custom_call.1} parent=5 // pred_region
        %s713 = ssub.s32 %s24, 2
        // Predicated region
        $region81: #{tpu_custom_call.1} parent=79 // pred_check
          %p714 = pneg %p215
        $region82: #{tpu_custom_call.1} parent=79 // pred_check_branch
          %716 = sbr.rel (%p714) target = $region84
        $region83: #{tpu_custom_call.1} parent=79 // pred_region
          %s717 = sand.u32 %s200, 1
          %s718 = scalar_lea.sflag [#allocation4], %s717
          %s719 = sand.u32 %s200, 1
          %s720 = smul.addr %s719, 8
          %s721 = scalar_lea.vmem [#allocation13], %s720
          %722 = dma.done %s718, 128
        $region84: #{tpu_custom_call.1} parent=79 // pred_fallthru
          _
      $region80: #{tpu_custom_call.1} parent=5 // pred_fallthru
        _
    $region6: #{tpu_custom_call.1} parent=1 // loop_footer
      %s28 = sadd.s32 1, %s24
    $region7: #{tpu_custom_call.1} parent=1 // loop_footer_branch
      %23 = sbr.rel target = $region3
    $region8: #{tpu_custom_call.1} parent=1 // loop_exit
      _
    %723 = vsyncpa [#allocation3], 1
    %s724 = scalar_lea.sflag [#allocation3], 1
    %725 = vsyncpa %s724, 1
    %726 = vsyncpa [#allocation6], 1
    %s727 = scalar_lea.sflag [#allocation6], 1
    %728 = vsyncpa %s727, 1
    %729 = vsyncpa [#allocation9], 1
    %730 = vsyncpa [#allocation12], 1
    %731 = vsyncpa [#allocation4], 1
    %s732 = scalar_lea.sflag [#allocation4], 1
    %733 = vsyncpa %s732, 1

</llo_original>
